<compile_context>
chip_gen: v7x
topology: tpu7x:2x2x1
jax: 0.10.0
libtpu: 0.0.40
codegen_flags: <defaults>
</compile_context>

<pallas_src>
import jax
import jax.numpy as jnp
import numpy as np
from jax.experimental import pallas as pl
from jax.experimental.pallas import tpu as pltpu


def _round_up(v, m):
    return ((v + m - 1) // m) * m


def _ssm_kernel(ctx_ref, colctx_ref, xu_ref, w_ref, o_ref):
    # ctx_ref:    (TB, 1)    int32   per-row context id (-1 on padded rows)
    # colctx_ref: (1, C*K)   int32   context id owning each expanded column
    # xu_ref:     (TB, C*K)  f32     [x|u] tiled C times along the lane dim
    # w_ref:      (C*K, S)   f32/bf16 flattened per-context weight bank
    # o_ref:      (TB, S)
    mask = colctx_ref[...] == ctx_ref[...]              # (TB, C*K) broadcast cmp
    xe = jnp.where(mask, xu_ref[...], 0.0).astype(w_ref.dtype)
    # Single MXU push per tile; result goes straight to the output tile.
    o_ref[...] = jnp.dot(
        xe, w_ref[...], preferred_element_type=jnp.float32
    ).astype(o_ref.dtype)


def prepare_ssm_weights(A_t, B_t, compute_dtype=jnp.float32):
    """One-time weight-bank preparation (hoisted out of the per-call path).

    A_t: (C, S, S) [in, out], B_t: (C, A, S) [in, out]  ->
    w_flat: (C*(S+A), S) laid out context-major as [A_0; B_0; A_1; B_1; ...].
    """
    num_context, state_dim, _ = A_t.shape
    action_dim = B_t.shape[1]
    w = jnp.concatenate([A_t, B_t], axis=1)              # (C, K, S)
    return w.reshape(num_context * (state_dim + action_dim),
                     state_dim).astype(compute_dtype)


def context_hyper_linear_ssm(x, u, context, w_flat):
    """x: (B, S), u: (B, A), context: (B, 1) int indices,
    w_flat: (C*(S+A), S) from prepare_ssm_weights.  Returns (B, S) in x.dtype."""
    batch, state_dim = x.shape
    action_dim = u.shape[1]
    k_dim = state_dim + action_dim
    ck = w_flat.shape[0]
    num_context = ck // k_dim

    # Per-row context ids.  NOTE: out-of-range ids are clipped to a valid
    # weight (the PyTorch gather would be undefined / raise instead).
    ctx = jnp.clip(context.reshape(batch, 1).astype(jnp.int32),
                   0, num_context - 1)

    # Expanded-activation columns: [x|u] repeated once per context.  Built in
    # the wrapper so the kernel needs no lane-dim concat/reshape; it is tiny
    # (C*K floats per row).
    # TODO(synk): form this in-kernel from separate x/u refs once unaligned
    # lane-dim concatenate is guaranteed by the target Mosaic version.
    xu_tiled = jnp.tile(jnp.concatenate([x, u], axis=1), (1, num_context))

    # Static map: expanded column -> owning context id (trace-time constant).
    col_ctx = jnp.asarray(np.arange(ck, dtype=np.int32) // k_dim,
                          dtype=jnp.int32).reshape(1, ck)

    # Batch tiling: multiple-of-8 rows, <=512 rows per tile, and >=2 grid
    # steps whenever batch > 8 (keeps both v7x TensorCores busy).
    b8 = _round_up(batch, 8)
    if b8 <= 8:
        tb = b8
    else:
        tb = min(512, _round_up(pl.cdiv(b8, 2), 8))
    b_pad = _round_up(b8, tb)
    if b_pad != batch:
        pad = b_pad - batch
        xu_tiled = jnp.pad(xu_tiled, ((0, pad), (0, 0)))
        # Padded rows get context -1 -> never match any column -> zero rows.
        ctx = jnp.pad(ctx, ((0, pad), (0, 0)), constant_values=-1)

    grid = (b_pad // tb,)
    out = pl.pallas_call(
        _ssm_kernel,
        out_shape=jax.ShapeDtypeStruct((b_pad, state_dim), x.dtype),
        grid_spec=pltpu.PrefetchScalarGridSpec(
            num_scalar_prefetch=0,
            grid=grid,
            in_specs=[
                pl.BlockSpec((tb, 1), lambda i: (i, 0)),
                pl.BlockSpec((1, ck), lambda i: (0, 0)),
                pl.BlockSpec((tb, ck), lambda i: (i, 0)),
                # Whole flattened weight bank resident in VMEM; constant block
                # index -> DMA'd once, not per grid step.
                # TODO(synk): for large banks on v7x (64 MiB VMEM) single-
                # buffer it / raise vmem_limit_bytes in CompilerParams.
                pl.BlockSpec((ck, state_dim), lambda i: (0, 0)),
            ],
            out_specs=pl.BlockSpec((tb, state_dim), lambda i: (i, 0)),
        ),
        compiler_params=pltpu.CompilerParams(
            dimension_semantics=("parallel",)),
    )(ctx, col_ctx, xu_tiled, w_flat)
    return out[:batch]


def make_params(key, state_dim, action_dim, num_context,
                adj_xx=None, adj_xu=None, dtype=jnp.float32):
    """Deterministic parameter init mirroring ContextHyperMatrix shapes.
    Weights stored PyTorch-style [num_context, out, in], masked by adjacency
    matrices if given, then transposed to [num_context, in, out]."""
    kA, kB = jax.random.split(key)
    A_w = jax.random.normal(kA, (num_context, state_dim, state_dim), dtype) * 0.1
    B_w = jax.random.normal(kB, (num_context, state_dim, action_dim), dtype) * 0.1
    if adj_xx is not None:
        A_w = A_w * adj_xx[None, :, :].astype(dtype)
    if adj_xu is not None:
        B_w = B_w * adj_xu[None, :, :].astype(dtype)
    A_t = jnp.transpose(A_w, (0, 2, 1))  # [C, in=S,  out=S]
    B_t = jnp.transpose(B_w, (0, 2, 1))  # [C, in=A,  out=S]
    return A_t, B_t


if __name__ == "__main__":
    state_dim, action_dim, num_context, batch = 8, 4, 3, 13

    key = jax.random.PRNGKey(0)
    k_adj1, k_adj2, k_par, kx, ku, kc = jax.random.split(key, 6)

    # Deterministic adjacency masks (structure constraints on A, B).
    adj_xx = (jax.random.uniform(k_adj1, (state_dim, state_dim)) > 0.3).astype(jnp.float32)
    adj_xu = (jax.random.uniform(k_adj2, (state_dim, action_dim)) > 0.3).astype(jnp.float32)

    A_t, B_t = make_params(k_par, state_dim, action_dim, num_context, adj_xx, adj_xu)

    x = jax.random.normal(kx, (batch, state_dim), jnp.float32)
    u = jax.random.normal(ku, (batch, action_dim), jnp.float32)
    context = jax.random.randint(kc, (batch, 1), 0, num_context, jnp.int32)

    # Plain-JAX reference: y[b] = A[c_b] @ x[b] + B[c_b] @ u[b]
    c = context.reshape(batch)
    y_ref = (jnp.einsum("bi,bio->bo", x, A_t[c]) +
             jnp.einsum("bi,bio->bo", u, B_t[c]))

    # f32 compute path (tight tolerance).
    w_f32 = prepare_ssm_weights(A_t, B_t, jnp.float32)
    y = jax.block_until_ready(context_hyper_linear_ssm(x, u, context, w_f32))
    np.testing.assert_allclose(np.asarray(y), np.asarray(y_ref), rtol=1e-5, atol=1e-5)

    # bf16 compute path (native MXU dtype on v5e/v6e/v7x; looser tolerance).
    w_bf16 = prepare_ssm_weights(A_t, B_t, jnp.bfloat16)
    y16 = jax.block_until_ready(context_hyper_linear_ssm(x, u, context, w_bf16))
    np.testing.assert_allclose(np.asarray(y16), np.asarray(y_ref), rtol=2e-2, atol=2e-2)

    # TODO(synk): rollout() is a sequential time loop in the original module;
    # a performant version would keep the state and the resident weight bank
    # in VMEM inside one pallas_call with time as a trailing "arbitrary" grid
    # axis instead of re-launching this kernel once per step.

    print("KERNEL_OK")
</pallas_src>

<mosaic_0001>
module attributes {stable_mosaic.version = 11 : i64} {
  func.func @_ssm_kernel(%arg0: i32, %arg1: memref<8x1xi32, #tpu.memory_space<vmem>>, %arg2: memref<1x36xi32, #tpu.memory_space<vmem>>, %arg3: memref<8x36xf32, #tpu.memory_space<vmem>>, %arg4: memref<36x8xf32, #tpu.memory_space<vmem>>, %arg5: memref<8x8xf32, #tpu.memory_space<vmem>>) attributes {dimension_semantics = [#tpu.dimension_semantics<parallel>], iteration_bounds = array<i64: 2>, scalar_prefetch = 0 : i64, scratch_operands = 0 : i64, tpu.core_type = #tpu.core_type<tc>, window_params = [{transform_indices = @transform_0, window_bounds = array<i64: 8, 1>}, {pipeline_mode = #tpu.pipeline_mode<synchronous>, transform_indices = @transform_1, window_bounds = array<i64: 1, 36>}, {transform_indices = @transform_2, window_bounds = array<i64: 8, 36>}, {pipeline_mode = #tpu.pipeline_mode<synchronous>, transform_indices = @transform_3, window_bounds = array<i64: 36, 8>}, {transform_indices = @transform_4, window_bounds = array<i64: 8, 8>}]} {
    %c0 = arith.constant 0 : index
    %c0_0 = arith.constant 0 : index
    %0 = vector.load %arg2[%c0, %c0_0] : memref<1x36xi32, #tpu.memory_space<vmem>>, vector<1x36xi32>
    %c0_1 = arith.constant 0 : index
    %c0_2 = arith.constant 0 : index
    %1 = vector.load %arg1[%c0_1, %c0_2] : memref<8x1xi32, #tpu.memory_space<vmem>>, vector<8x1xi32>
    %2 = vector.broadcast %0 : vector<1x36xi32> to vector<8x36xi32>
    %3 = vector.broadcast %1 : vector<8x1xi32> to vector<8x36xi32>
    %4 = arith.cmpi eq, %2, %3 : vector<8x36xi32>
    %c0_3 = arith.constant 0 : index
    %c0_4 = arith.constant 0 : index
    %5 = vector.load %arg3[%c0_3, %c0_4] : memref<8x36xf32, #tpu.memory_space<vmem>>, vector<8x36xf32>
    %cst = arith.constant 0.000000e+00 : f32
    %6 = vector.broadcast %cst : f32 to vector<8x36xf32>
    %7 = arith.select %4, %5, %6 : vector<8x36xi1>, vector<8x36xf32>
    %c0_5 = arith.constant 0 : index
    %c0_6 = arith.constant 0 : index
    %8 = vector.load %arg4[%c0_5, %c0_6] : memref<36x8xf32, #tpu.memory_space<vmem>>, vector<36x8xf32>
    %cst_7 = arith.constant dense<0.000000e+00> : vector<8x8xf32>
    %9 = tpu.matmul %7, %8, %cst_7 {dimension_numbers = #tpu.dot_dimension_numbers<[1], [0], [0], [1], [0, 0, 1, 1], [], []>} : vector<8x36xf32>, vector<36x8xf32>, vector<8x8xf32> -> vector<8x8xf32>
    %c0_8 = arith.constant 0 : index
    %c0_9 = arith.constant 0 : index
    %10 = vector.load %arg5[%c0_8, %c0_9] : memref<8x8xf32, #tpu.memory_space<vmem>>, vector<8x8xf32>
    tpu.vector_store %arg5[%c0_8, %c0_9], %9 {strides = array<i32>} : memref<8x8xf32, #tpu.memory_space<vmem>>, vector<8x8xf32>,
    return
  }
  func.func @transform_0(%arg0: i32) -> (i32, i32) {
    %c0_i32 = arith.constant 0 : i32
    %c0_i32_0 = arith.constant 0 : i32
    return %arg0, %c0_i32 : i32, i32
  }
  func.func @transform_1(%arg0: i32) -> (i32, i32) {
    %c0_i32 = arith.constant 0 : i32
    %c0_i32_0 = arith.constant 0 : i32
    %c0_i32_1 = arith.constant 0 : i32
    return %c0_i32, %c0_i32_0 : i32, i32
  }
  func.func @transform_2(%arg0: i32) -> (i32, i32) {
    %c0_i32 = arith.constant 0 : i32
    %c0_i32_0 = arith.constant 0 : i32
    return %arg0, %c0_i32 : i32, i32
  }
  func.func @transform_3(%arg0: i32) -> (i32, i32) {
    %c0_i32 = arith.constant 0 : i32
    %c0_i32_0 = arith.constant 0 : i32
    %c0_i32_1 = arith.constant 0 : i32
    return %c0_i32, %c0_i32_0 : i32, i32
  }
  func.func @transform_4(%arg0: i32) -> (i32, i32) {
    %c0_i32 = arith.constant 0 : i32
    %c0_i32_0 = arith.constant 0 : i32
    return %arg0, %c0_i32 : i32, i32
  }
}

</mosaic_0001>

<llo_original>
// kernel: tpu_custom_call.1
$region0: #{tpu_custom_call.1}
  #allocation0 [shape = 'u32[]', space=smem, size = 0x4, offset = 0x4, fixed_abs, tag = 'smem constant byte address 0x4 - core index']
  #allocation1 [shape = 'u32[144,128]{1,0:T(1,128)}', space=vmem, size = 0x12000, scoped, tag = 'internal scratch']
  %s0 = inlined_call_operand.vmem [shape: s32[16,1], index: 0, kind: input, shape index: {}]
  %s1 = inlined_call_operand.vmem [shape: s32[1,36], index: 1, kind: input, shape index: {}]
  %s2 = inlined_call_operand.vmem [shape: f32[16,36], index: 2, kind: input, shape index: {}]
  %s3 = inlined_call_operand.vmem [shape: f32[36,8], index: 3, kind: input, shape index: {}]
  %s4 = inlined_call_operand.vmem [shape: f32[16,8], index: 4, kind: output, shape index: {}]
  %s5 = sld [smem:[#allocation0]]
  $region49: #{tpu_custom_call.1} parent=0
    _
  %s7 = ssub.s32 1, %s5
  %s8 = scalar_select 0, %s7, %s5
  loop: start=0, step=1, limit=4
  $region2: #{tpu_custom_call.1} parent=0 // loop_pre_header
    _
  $region3: #{tpu_custom_call.1} parent=0 // loop_header
    %s10 = sphi 0, %s14
    %p11 = scmp.ge.s32.totalorder %s10, 4
    %s20 = sphi 0, %s22
    %s23 = sphi 0, %s20
    %s24 = sphi 0, %s23
    %s40 = sphi 0, %s24
    %s44 = sphi 0, %s44
    %s46 = sphi 0, %s44
    %s47 = sphi 0, %s46
    %s61 = sphi 0, %s47
    %s67 = sphi 0, %s69
    %s70 = sphi 0, %s67
    %s71 = sphi 0, %s70
    %s87 = sphi 0, %s71
    %s91 = sphi 0, %s91
    %s93 = sphi 0, %s91
    %s94 = sphi 0, %s93
    %s108 = sphi 0, %s94
    %s114 = sphi 0, %s116
    %s117 = sphi 0, %s114
    %s118 = sphi 0, %s117
    %s134 = sphi 0, %s118
  $region4: #{tpu_custom_call.1} parent=0 // loop_header_branch
    %13 = sbr.rel (%p11) target = $region8
  $region5: #{tpu_custom_call.1} parent=0 // loop_body
    %s15 = ssub.s32 %s10, 1
    %s16 = ssub.s32 %s10, 2
    %s17 = sadd.s32 %s10, 1
    %s18 = ssub.s32 %s10, %s17
    %p19 = scmp.eq.s32.totalorder %s18, 0
    %s21 = sadd.s32 %s20, 1
    %s22 = scalar_select %p19, %s20, %s21
    %p25 = pneg %p19
    %p26 = scmp.eq.s32.totalorder %s10, 1
    %p27 = por %p25, %p26
    %p28 = scmp.ne.s32.totalorder %s20, %s23
    %p29 = scmp.eq.s32.totalorder %s10, 0
    %p30 = por %p28, %p29
    %p31 = scmp.ne.s32.totalorder %s20, %s23
    %p32 = scmp.eq.s32.totalorder %s15, 1
    %p33 = por %p31, %p32
    %p34 = scmp.ne.s32.totalorder %s23, %s24
    %p35 = scmp.eq.s32.totalorder %s15, 0
    %p36 = por %p34, %p35
    %p37 = scmp.ne.s32.totalorder %s23, %s24
    %p38 = scmp.eq.s32.totalorder %s16, 1
    %p39 = por %p37, %p38
    %p41 = scmp.ne.s32.totalorder %s24, %s40
    %p42 = scmp.eq.s32.totalorder %s16, 0
    %p43 = por %p41, %p42
    %s45 = sadd.s32 %s44, 1
    %p48 = scmp.eq.s32.totalorder %s10, 1
    %p49 = scmp.ne.s32.totalorder %s44, %s46
    %p50 = scmp.eq.s32.totalorder %s10, 0
    %p51 = por %p49, %p50
    %p52 = scmp.ne.s32.totalorder %s44, %s46
    %p53 = scmp.eq.s32.totalorder %s15, 1
    %p54 = por %p52, %p53
    %p55 = scmp.ne.s32.totalorder %s46, %s47
    %p56 = scmp.eq.s32.totalorder %s15, 0
    %p57 = por %p55, %p56
    %p58 = scmp.ne.s32.totalorder %s46, %s47
    %p59 = scmp.eq.s32.totalorder %s16, 1
    %p60 = por %p58, %p59
    %p62 = scmp.ne.s32.totalorder %s47, %s61
    %p63 = scmp.eq.s32.totalorder %s16, 0
    %p64 = por %p62, %p63
    %s65 = ssub.s32 %s10, %s17
    %p66 = scmp.eq.s32.totalorder %s65, 0
    %s68 = sadd.s32 %s67, 1
    %s69 = scalar_select %p66, %s67, %s68
    %p72 = pneg %p66
    %p73 = scmp.eq.s32.totalorder %s10, 1
    %p74 = por %p72, %p73
    %p75 = scmp.ne.s32.totalorder %s67, %s70
    %p76 = scmp.eq.s32.totalorder %s10, 0
    %p77 = por %p75, %p76
    %p78 = scmp.ne.s32.totalorder %s67, %s70
    %p79 = scmp.eq.s32.totalorder %s15, 1
    %p80 = por %p78, %p79
    %p81 = scmp.ne.s32.totalorder %s70, %s71
    %p82 = scmp.eq.s32.totalorder %s15, 0
    %p83 = por %p81, %p82
    %p84 = scmp.ne.s32.totalorder %s70, %s71
    %p85 = scmp.eq.s32.totalorder %s16, 1
    %p86 = por %p84, %p85
    %p88 = scmp.ne.s32.totalorder %s71, %s87
    %p89 = scmp.eq.s32.totalorder %s16, 0
    %p90 = por %p88, %p89
    %s92 = sadd.s32 %s91, 1
    %p95 = scmp.eq.s32.totalorder %s10, 1
    %p96 = scmp.ne.s32.totalorder %s91, %s93
    %p97 = scmp.eq.s32.totalorder %s10, 0
    %p98 = por %p96, %p97
    %p99 = scmp.ne.s32.totalorder %s91, %s93
    %p100 = scmp.eq.s32.totalorder %s15, 1
    %p101 = por %p99, %p100
    %p102 = scmp.ne.s32.totalorder %s93, %s94
    %p103 = scmp.eq.s32.totalorder %s15, 0
    %p104 = por %p102, %p103
    %p105 = scmp.ne.s32.totalorder %s93, %s94
    %p106 = scmp.eq.s32.totalorder %s16, 1
    %p107 = por %p105, %p106
    %p109 = scmp.ne.s32.totalorder %s94, %s108
    %p110 = scmp.eq.s32.totalorder %s16, 0
    %p111 = por %p109, %p110
    %s112 = ssub.s32 %s10, %s17
    %p113 = scmp.eq.s32.totalorder %s112, 0
    %s115 = sadd.s32 %s114, 1
    %s116 = scalar_select %p113, %s114, %s115
    %p119 = pneg %p113
    %p120 = scmp.eq.s32.totalorder %s10, 1
    %p121 = por %p119, %p120
    %p122 = scmp.ne.s32.totalorder %s114, %s117
    %p123 = scmp.eq.s32.totalorder %s10, 0
    %p124 = por %p122, %p123
    %p125 = scmp.ne.s32.totalorder %s114, %s117
    %p126 = scmp.eq.s32.totalorder %s15, 1
    %p127 = por %p125, %p126
    %p128 = scmp.ne.s32.totalorder %s117, %s118
    %p129 = scmp.eq.s32.totalorder %s15, 0
    %p130 = por %p128, %p129
    %p131 = scmp.ne.s32.totalorder %s117, %s118
    %p132 = scmp.eq.s32.totalorder %s16, 1
    %p133 = por %p131, %p132
    %p135 = scmp.ne.s32.totalorder %s118, %s134
    %p136 = scmp.eq.s32.totalorder %s16, 0
    %p137 = por %p135, %p136
    %p138 = scmp.le.s32.totalorder 1, %s10
    %p139 = scmp.lt.s32.totalorder %s10, 3
    %p140 = pnand %p138, %p139
    %p141 = pneg %p140
    // Predicated region
    $region9: #{tpu_custom_call.1} parent=5 // pred_check
      _
    $region10: #{tpu_custom_call.1} parent=5 // pred_check_branch
      %143 = sbr.rel (%p140) target = $region12
    $region11: #{tpu_custom_call.1} parent=5 // pred_region
      %s144 = ssub.s32 %s10, 1
      // Predicated region
      $region13: #{tpu_custom_call.1} parent=11 // pred_check
        %p145 = pneg %p57
      $region14: #{tpu_custom_call.1} parent=11 // pred_check_branch
        %147 = sbr.rel (%p145) target = $region16
      $region15: #{tpu_custom_call.1} parent=11 // pred_region
        _
      $region16: #{tpu_custom_call.1} parent=11 // pred_fallthru
        _
      // Predicated region
      $region17: #{tpu_custom_call.1} parent=11 // pred_check
        %p148 = pneg %p104
      $region18: #{tpu_custom_call.1} parent=11 // pred_check_branch
        %150 = sbr.rel (%p148) target = $region20
      $region19: #{tpu_custom_call.1} parent=11 // pred_region
        _
      $region20: #{tpu_custom_call.1} parent=11 // pred_fallthru
        _
    $region12: #{tpu_custom_call.1} parent=5 // pred_fallthru
      _
    %p151 = scmp.lt.s32.totalorder %s10, 2
    // Predicated region
    $region21: #{tpu_custom_call.1} parent=5 // pred_check
      %p152 = pneg %p151
    $region22: #{tpu_custom_call.1} parent=5 // pred_check_branch
      %154 = sbr.rel (%p152) target = $region24
    $region23: #{tpu_custom_call.1} parent=5 // pred_region
      // Predicated region
      $region25: #{tpu_custom_call.1} parent=23 // pred_check
        %p155 = pneg %p30
      $region26: #{tpu_custom_call.1} parent=23 // pred_check_branch
        %157 = sbr.rel (%p155) target = $region28
      $region27: #{tpu_custom_call.1} parent=23 // pred_region
        %p158 = scmp.lt.s32.totalorder %s10, 1
        %s159 = scalar_select %p158, %s10, 1
        %s160 = smul.addr %s159, 8
        %s161 = scalar_lea.vmem %s0, %s160
      $region28: #{tpu_custom_call.1} parent=23 // pred_fallthru
        _
      // Predicated region
      $region29: #{tpu_custom_call.1} parent=23 // pred_check
        %p162 = pneg %p77
      $region30: #{tpu_custom_call.1} parent=23 // pred_check_branch
        %164 = sbr.rel (%p162) target = $region32
      $region31: #{tpu_custom_call.1} parent=23 // pred_region
        %p165 = scmp.lt.s32.totalorder %s10, 1
        %s166 = scalar_select %p165, %s10, 1
        %s167 = smul.addr %s166, 8
        %s168 = scalar_lea.vmem %s2, %s167
      $region32: #{tpu_custom_call.1} parent=23 // pred_fallthru
        _
    $region24: #{tpu_custom_call.1} parent=5 // pred_fallthru
      _
    %p169 = scmp.le.s32.totalorder 1, %s10
    %p170 = scmp.lt.s32.totalorder %s10, 3
    %p171 = pnand %p169, %p170
    %p172 = pneg %p171
    // Predicated region
    $region33: #{tpu_custom_call.1} parent=5 // pred_check
      _
    $region34: #{tpu_custom_call.1} parent=5 // pred_check_branch
      %174 = sbr.rel (%p171) target = $region36
    $region35: #{tpu_custom_call.1} parent=5 // pred_region
      %s175 = ssub.s32 %s10, 1
      %p176 = scmp.lt.s32.totalorder %s15, 1
      %s177 = scalar_select %p176, %s15, 1
      %s178 = smul.addr %s177, 8
      %s179 = scalar_lea.vmem %s0, %s178
      %p180 = pneg %p36
      %p181 = pneg %p33
      %p182 = pneg %p57
      %p183 = pneg %p54
      %p184 = scmp.lt.s32.totalorder %s15, 1
      %s185 = scalar_select %p184, %s15, 1
      %s186 = smul.addr %s185, 8
      %s187 = scalar_lea.vmem %s2, %s186
      %p188 = pneg %p83
      %p189 = pneg %p80
      %p190 = pneg %p104
      %p191 = pneg %p101
      %p192 = pneg %p130
      %p193 = pneg %p127
      %p194 = scmp.lt.s32.totalorder %s15, 1
      %s195 = scalar_select %p194, %s15, 1
      %s196 = smul.addr %s195, 8
      %s197 = scalar_lea.vmem %s4, %s196
      %p198 = scmp.lt.s32.totalorder %s15, 1
      %s199 = scalar_select %p198, %s15, 1
      %s200 = smul.addr %s199, 8
      %s201 = scalar_lea.vmem %s0, %s200
      %p202 = scmp.lt.s32.totalorder %s15, 1
      %s203 = scalar_select %p202, %s15, 1
      %s204 = smul.addr %s203, 8
      %s205 = scalar_lea.vmem %s2, %s204
      %p206 = scmp.lt.s32.totalorder %s15, 1
      %s207 = scalar_select %p206, %s15, 1
      %s208 = smul.addr %s207, 8
      %s209 = scalar_lea.vmem %s4, %s208
      %v210 = vld [vmem:[%s1] sm:$0x1]
      %v211 = vld [vmem:[%s201] sm:$0xff]
      %v212 = vlaneseq
      %v213 = vshrl.u32 %v212, 7
      %v214 = vsub.s32 0, %v213
      %v215 = vrot.slane %v210, %v214
      %216 = vset.pattern.permute.xlu0 0
      %217 = vperm.xlu0 %216, %v211
      %v218 = vpop.permute.xlu0 %217
      %vm219 = vcmp.eq.s32.totalorder %v215, %v218
      %v220 = vld [vmem:[%s205] sm:$0xff]
      %v221 = vsel %vm219, %v220, 0.0
      %v222 = vld [vmem:[%s3] sm:$0xff]
      %v223 = vld [vmem:[%s3 + $0x8] sm:$0xff]
      %v224 = vld [vmem:[%s3 + $0x10] sm:$0xff]
      %v225 = vld [vmem:[%s3 + $0x18] sm:$0xff]
      %v226 = vld [vmem:[%s3 + $0x20] sm:$0xf]
      %vm227 = vcmask 293888
      %v229 = vsel %vm227, %v221, 0
      %vm231 = vcmask 1043456
      %v233 = vsel %vm231, %v226, 0
      %235 = vmatprep.subr.mxu0 0.0
      %236 = vmatpush1.msra.mxu0 %v222
      %237 = vmatprep.subr.mxu0 0.0
      %238 = vmatpush1.msra.mxu0 %v223
      %239 = vmatprep.subr.mxu0 0.0
      %240 = vmatpush1.msra.mxu0 %v224
      %241 = vmatprep.subr.mxu0 0.0
      %242 = vmatpush1.msra.mxu0 %v225
      %243 = vmatprep.subr.mxu0 0.0
      %244 = vmatpush1.msra.mxu0 %v233
      %245 = vmatprep.subr.mxu0 0.0
      %246 = vmatpush1.msra.mxu0 0.0
      %247 = vmatprep.subr.mxu0 0.0
      %248 = vmatpush1.msra.mxu0 0.0
      %249 = vmatprep.subr.mxu0 0.0
      %250 = vmatpush1.msra.mxu0 0.0
      %251 = vmatprep.subr.mxu0 0.0
      %252 = vmatpush1.msra.mxu0 0.0
      %253 = vmatprep.subr.mxu0 0.0
      %254 = vmatpush1.msra.mxu0 0.0
      %255 = vmatprep.subr.mxu0 0.0
      %256 = vmatpush1.msra.mxu0 0.0
      %257 = vmatprep.subr.mxu0 0.0
      %258 = vmatpush1.msra.mxu0 0.0
      %259 = vmatprep.subr.mxu0 0.0
      %260 = vmatpush1.msra.mxu0 0.0
      %261 = vmatprep.subr.mxu0 0.0
      %262 = vmatpush1.msra.mxu0 0.0
      %263 = vmatprep.subr.mxu0 0.0
      %264 = vmatpush1.msra.mxu0 0.0
      %265 = vmatprep.subr.mxu0 0.0
      %266 = vmatpush1.msra.mxu0 0.0
      %267 = vmatprep.subr.mxu0 0.0
      %268 = vmatpush1.msra.mxu0 0.0
      %269 = vmatprep.subr.mxu0 0.0
      %270 = vmatpush1.msra.mxu0 0.0
      %271 = vmatprep.subr.mxu0 0.0
      %272 = vmatpush1.msra.mxu0 0.0
      %273 = vmatprep.subr.mxu0 0.0
      %274 = vmatpush1.msra.mxu0 0.0
      %275 = vmatprep.subr.mxu0 0.0
      %276 = vmatpush1.msra.mxu0 0.0
      %277 = vmatprep.subr.mxu0 0.0
      %278 = vmatpush1.msra.mxu0 0.0
      %279 = vmatprep.subr.mxu0 0.0
      %280 = vmatpush1.msra.mxu0 0.0
      %281 = vmatprep.subr.mxu0 0.0
      %282 = vmatpush1.msra.mxu0 0.0
      %283 = vmatprep.subr.mxu0 0.0
      %284 = vmatpush1.msra.mxu0 0.0
      %285 = vmatprep.subr.mxu0 0.0
      %286 = vmatpush1.msra.mxu0 0.0
      %287 = vmatprep.subr.mxu0 0.0
      %288 = vmatpush1.msra.mxu0 0.0
      %289 = vmatprep.subr.mxu0 0.0
      %290 = vmatpush1.msra.mxu0 0.0
      %291 = vmatprep.subr.mxu0 0.0
      %292 = vmatpush1.msra.mxu0 0.0
      %293 = vmatprep.subr.mxu0 0.0
      %294 = vmatpush1.msra.mxu0 0.0
      %295 = vmatprep.subr.mxu0 0.0
      %296 = vmatpush1.msra.mxu0 0.0
      %297 = vmatprep.subr.mxu0 0.0
      %298 = vmatpush1.msra.mxu0 0.0
      %299 = vmatprep.mubr.f32.mxu0 0.0
      %300 = vmatmul.mubr.f32.gmra.mrb[0].mxu0 %v229
      %v301 = vpop.f32.mrb[0].mxu0
      %v302 = vadd.f32 0.0, %v301
      %v303 = vpop.f32.mrb[0].mxu0
      %304 = vdwg.mxu0
      %vm305 = vcmask 64512
      %306 = vst.msk [vmem:[%s209] sm:$0xff] %vm305, %v302
      %p307 = scmp.lt.s32.totalorder %s15, 1
      %s308 = scalar_select %p307, %s15, 1
      %s309 = smul.addr %s308, 8
      %s310 = scalar_lea.vmem %s4, %s309
      // Predicated region
      $region37: #{tpu_custom_call.1} parent=35 // pred_check
        %p311 = pneg %p127
      $region38: #{tpu_custom_call.1} parent=35 // pred_check_branch
        %313 = sbr.rel (%p311) target = $region40
      $region39: #{tpu_custom_call.1} parent=35 // pred_region
        _
      $region40: #{tpu_custom_call.1} parent=35 // pred_fallthru
        _
    $region36: #{tpu_custom_call.1} parent=5 // pred_fallthru
      _
    %p314 = scmp.le.s32.totalorder 2, %s10
    // Predicated region
    $region41: #{tpu_custom_call.1} parent=5 // pred_check
      %p315 = pneg %p314
    $region42: #{tpu_custom_call.1} parent=5 // pred_check_branch
      %317 = sbr.rel (%p315) target = $region44
    $region43: #{tpu_custom_call.1} parent=5 // pred_region
      %s318 = ssub.s32 %s10, 2
      // Predicated region
      $region45: #{tpu_custom_call.1} parent=43 // pred_check
        %p319 = pneg %p133
      $region46: #{tpu_custom_call.1} parent=43 // pred_check_branch
        %321 = sbr.rel (%p319) target = $region48
      $region47: #{tpu_custom_call.1} parent=43 // pred_region
        %p322 = scmp.lt.s32.totalorder %s16, 1
        %s323 = scalar_select %p322, %s16, 1
        %s324 = smul.addr %s323, 8
        %s325 = scalar_lea.vmem %s4, %s324
      $region48: #{tpu_custom_call.1} parent=43 // pred_fallthru
        _
    $region44: #{tpu_custom_call.1} parent=5 // pred_fallthru
      _
  $region6: #{tpu_custom_call.1} parent=0 // loop_footer
    %s14 = sadd.s32 1, %s10
  $region7: #{tpu_custom_call.1} parent=0 // loop_footer_branch
    %9 = sbr.rel target = $region3
  $region8: #{tpu_custom_call.1} parent=0 // loop_exit
    _

</llo_original>
